<compile_context>
chip_gen: v6e
topology: v6e:2x2x1
jax: 0.10.0
libtpu: 0.0.40
codegen_flags: <defaults>
</compile_context>

<pallas_src>
import functools

import numpy as np
import jax
import jax.numpy as jnp
from jax.experimental import pallas as pl
from jax.experimental.pallas import tpu as pltpu

# LOG_STD_MIN / LOG_STD_MAX are referenced but not defined in the original
# snippet; use the standard SAC-style clamp values.
# TODO(synk): these must match the PyTorch module's clamp constants.
LOG_STD_MIN = -20.0
LOG_STD_MAX = 2.0
_LOG_SQRT_2PI = 0.5 * float(np.log(2.0 * np.pi))
_NEG_BIG = -1e30  # finite "minus infinity" for padded mixture lanes (no inf-inf NaNs)


def _round_up(v, m):
    return ((v + m - 1) // m) * m


def _cluster_kernel(x_ref, invvar_ref, whi_ref, wlo_ref, bias_ref, logmix_ref,
                    post_ref, comp_ref, logdata_ref, kl_ref, *, n_mix):
    f32 = jnp.float32
    x = x_ref[...].astype(f32)                                   # [TB, D]
    inv_var = invvar_ref[...]                                    # [1, D]

    # ---- component log-prob via expanded quadratic form on the MXU ----------
    # comp_lp[b, m] = -0.5*sum_d x^2*inv_var + sum_d x*(mu*inv_var) + bias[m]
    # Weights are pre-scaled / pre-split (bf16 hi/lo) in the wrapper; split x
    # here so the contraction is 3 single-pass bf16 matmuls (~f32 accuracy).
    dn = (((1,), (0,)), ((), ()))
    x_hi = x.astype(jnp.bfloat16)
    x_lo = (x - x_hi.astype(f32)).astype(jnp.bfloat16)
    w_hi = whi_ref[...]                                          # [D, Npad] bf16
    w_lo = wlo_ref[...]                                          # [D, Npad] bf16
    cross = (
        jax.lax.dot_general(x_hi, w_hi, dn, preferred_element_type=f32)
        + jax.lax.dot_general(x_lo, w_hi, dn, preferred_element_type=f32)
        + jax.lax.dot_general(x_hi, w_lo, dn, preferred_element_type=f32)
    )                                                            # [TB, Npad]
    xsq = jnp.sum(x * x * inv_var, axis=-1, keepdims=True)       # [TB, 1]
    comp_lp = cross + bias_ref[...] - 0.5 * xsq                  # real at lanes 0:M

    # ---- posterior / logsumexp (single exp over the tile) -------------------
    combined = comp_lp + logmix_ref[...]                         # padded lanes ~ -1e30
    cmax = jnp.max(combined, axis=-1, keepdims=True)             # [TB, 1]
    p = jnp.exp(combined - cmax)                                 # padded lanes -> 0
    denom = jnp.sum(p, axis=-1, keepdims=True)                   # [TB, 1]
    posterior = p * pl.reciprocal(denom)                         # exact reciprocal
    log_px = cmax + jnp.log(denom)                               # [TB, 1]

    # ---- ELBO terms ----------------------------------------------------------
    # log_post - log_mix == comp_lp - log_px; posterior is 0 on padded lanes.
    log_data = jnp.sum(posterior * comp_lp, axis=-1, keepdims=True)        # [TB, 1]
    kl = jnp.sum(posterior * (comp_lp - log_px), axis=-1, keepdims=True)   # [TB, 1]

    # ---- narrow writeback (no 128-lane slab) ---------------------------------
    post_ref[...] = posterior[:, :n_mix]
    comp_ref[...] = comp_lp[:, :n_mix]
    logdata_ref[...] = log_data
    kl_ref[...] = kl


def cluster_forward(x, comp_mean, comp_logstd, mix_logit, *, block_b=None):
    """Pallas equivalent of Cluster.forward(x, with_elbo=True)."""
    B, D = x.shape
    M = comp_mean.shape[0]
    Npad = _round_up(max(M, 1), 128)          # lane-dense weight / logit width

    # ---- hoisted constants (tiny one-time XLA ops) ---------------------------
    logstd = jnp.clip(comp_logstd.astype(jnp.float32), LOG_STD_MIN, LOG_STD_MAX)  # [1, D]
    inv_var = jnp.exp(-2.0 * logstd).reshape(1, D)                                # [1, D]
    mu = comp_mean.astype(jnp.float32)                                            # [M, D]

    musc = (mu * inv_var).T                                                       # [D, M]
    musc_pad = jnp.pad(musc, ((0, 0), (0, Npad - M)))                             # [D, Npad]
    w_hi = musc_pad.astype(jnp.bfloat16)
    w_lo = (musc_pad - w_hi.astype(jnp.float32)).astype(jnp.bfloat16)

    bias_m = (-0.5 * jnp.sum(mu * mu * inv_var, axis=-1)
              - jnp.sum(logstd) - D * _LOG_SQRT_2PI)                              # [M]
    bias_pad = jnp.pad(bias_m, (0, Npad - M)).reshape(1, Npad)                    # [1, Npad]

    log_mix_m = jax.nn.log_softmax(mix_logit.astype(jnp.float32).reshape(-1))     # [M]
    log_mix_pad = jnp.pad(log_mix_m, (0, Npad - M),
                          constant_values=_NEG_BIG).reshape(1, Npad)              # [1, Npad]

    # ---- batch tiling ---------------------------------------------------------
    # Larger tiles amortize the ~0.35 us/step overhead; keep >= 2 grid steps
    # for large B so dimension_semantics=("parallel",) can shard across the two
    # TensorCores on v7x.
    if block_b is None:
        if B <= 1024:
            block_b = _round_up(B, 8)
        else:
            block_b = min(4096, _round_up(-(-B // 2), 8))
    block_b = max(8, _round_up(block_b, 8))
    Bp = _round_up(B, block_b)
    xp = x if Bp == B else jnp.pad(x, ((0, Bp - B), (0, 0)))      # native dtype

    # Rough budget: ~14 live [block_b, 128]-f32 sized buffers (incl. the
    # double-buffered lane-padded x tile and Mosaic intermediates), floor at
    # 32 MiB, cap at 48 MiB to leave headroom on v7x's 64 MiB VMEM.
    vmem_limit = int(min(48 << 20, max(32 << 20, 14 * block_b * 512)))

    kernel = functools.partial(_cluster_kernel, n_mix=M)
    post, comp_lp, log_data, kl = pl.pallas_call(
        kernel,
        out_shape=(
            jax.ShapeDtypeStruct((Bp, M), jnp.float32),   # posterior
            jax.ShapeDtypeStruct((Bp, M), jnp.float32),   # comp_log_prob
            jax.ShapeDtypeStruct((Bp, 1), jnp.float32),   # log_data
            jax.ShapeDtypeStruct((Bp, 1), jnp.float32),   # kl_from_prior
        ),
        grid=(Bp // block_b,),
        in_specs=[
            pl.BlockSpec((block_b, D), lambda i: (i, 0)),   # x (tiled over batch)
            pl.BlockSpec((1, D), lambda i: (0, 0)),         # inv_var
            pl.BlockSpec((D, Npad), lambda i: (0, 0)),      # scaled means (hi)
            pl.BlockSpec((D, Npad), lambda i: (0, 0)),      # scaled means (lo)
            pl.BlockSpec((1, Npad), lambda i: (0, 0)),      # bias
            pl.BlockSpec((1, Npad), lambda i: (0, 0)),      # log mixture probs
        ],
        out_specs=(
            pl.BlockSpec((block_b, M), lambda i: (i, 0)),
            pl.BlockSpec((block_b, M), lambda i: (i, 0)),
            pl.BlockSpec((block_b, 1), lambda i: (i, 0)),
            pl.BlockSpec((block_b, 1), lambda i: (i, 0)),
        ),
        compiler_params=pltpu.CompilerParams(
            dimension_semantics=("parallel",),
            vmem_limit_bytes=vmem_limit),
    )(xp, inv_var, w_hi, w_lo, bias_pad, log_mix_pad)

    if Bp != B:
        post, comp_lp, log_data, kl = post[:B], comp_lp[:B], log_data[:B], kl[:B]
    elbo = dict(comp_log_prob=comp_lp,
                log_data=log_data[:, 0],
                kl_from_prior=kl[:, 0])
    return post, elbo


def _reference(x, comp_mean, comp_logstd, mix_logit):
    """Pure-JAX reference matching the PyTorch forward semantics."""
    logstd = jnp.clip(comp_logstd, LOG_STD_MIN, LOG_STD_MAX)
    std = jnp.exp(logstd)
    xe = x[:, None, :]                                            # [B, 1, D]
    comp_lp = jnp.sum(-0.5 * ((xe - comp_mean[None]) / std) ** 2
                      - logstd - _LOG_SQRT_2PI, axis=-1)          # [B, M]
    log_mix = jax.nn.log_softmax(mix_logit)[None]                 # [1, M]
    log_px = jax.scipy.special.logsumexp(comp_lp + log_mix, axis=-1, keepdims=True)
    log_post = comp_lp + log_mix - log_px
    post = jnp.exp(log_post)
    log_data = jnp.sum(post * comp_lp, axis=-1)
    kl = jnp.sum(post * (log_post - log_mix), axis=-1)
    return post, comp_lp, log_data, kl


if __name__ == "__main__":
    # args.n_latent_landmarks = 8, args.embed_size = 32, batch = 10
    # (batch deliberately not a multiple of 8 to exercise the padding path).
    n_mix, z_dim, batch = 8, 32, 10

    key = jax.random.PRNGKey(0)
    k1, k2, k3 = jax.random.split(key, 3)

    # Deterministic synthetic parameters (matches __init__ shapes/scales).
    comp_mean = jax.random.normal(k1, (n_mix, z_dim), jnp.float32) * np.sqrt(1.0 / n_mix)
    comp_logstd = jax.random.normal(k2, (1, z_dim), jnp.float32) * (1.0 / np.e)
    mix_logit = jnp.ones((n_mix,), jnp.float32)

    x = jax.random.normal(k3, (batch, z_dim), jnp.float32)

    posterior, elbo = cluster_forward(x, comp_mean, comp_logstd, mix_logit)
    jax.block_until_ready(posterior)

    ref_post, ref_lp, ref_ld, ref_kl = _reference(x, comp_mean, comp_logstd, mix_logit)
    np.testing.assert_allclose(np.asarray(posterior), np.asarray(ref_post),
                               rtol=1e-4, atol=2e-4)
    np.testing.assert_allclose(np.asarray(elbo["comp_log_prob"]), np.asarray(ref_lp),
                               rtol=1e-4, atol=1e-3)
    np.testing.assert_allclose(np.asarray(elbo["log_data"]), np.asarray(ref_ld),
                               rtol=1e-4, atol=1e-3)
    np.testing.assert_allclose(np.asarray(elbo["kl_from_prior"]), np.asarray(ref_kl),
                               rtol=1e-4, atol=5e-4)
    # posterior rows must be normalized
    np.testing.assert_allclose(np.asarray(posterior).sum(-1), np.ones(batch),
                               rtol=1e-5, atol=1e-5)

    # TODO(synk): only Cluster.forward(with_elbo=True) is implemented; the Adam
    # optimizer / embed_loss training step and CUDA-memory-based max_sim /
    # remaining_memory / get_cluster_id helpers have no Pallas-kernel equivalent.
    print("KERNEL_OK")
</pallas_src>

<mosaic_0001>
module attributes {stable_mosaic.version = 11 : i64} {
  func.func @_cluster_kernel(%arg0: i32, %arg1: memref<16x32xf32, #tpu.memory_space<vmem>>, %arg2: memref<1x32xf32, #tpu.memory_space<vmem>>, %arg3: memref<32x128xbf16, #tpu.memory_space<vmem>>, %arg4: memref<32x128xbf16, #tpu.memory_space<vmem>>, %arg5: memref<1x128xf32, #tpu.memory_space<vmem>>, %arg6: memref<1x128xf32, #tpu.memory_space<vmem>>, %arg7: memref<16x8xf32, #tpu.memory_space<vmem>>, %arg8: memref<16x8xf32, #tpu.memory_space<vmem>>, %arg9: memref<16x1xf32, #tpu.memory_space<vmem>>, %arg10: memref<16x1xf32, #tpu.memory_space<vmem>>) attributes {dimension_semantics = [#tpu.dimension_semantics<parallel>], iteration_bounds = array<i64: 1>, scalar_prefetch = 0 : i64, scratch_operands = 0 : i64, tpu.core_type = #tpu.core_type<tc>, window_params = [{transform_indices = @transform_0, window_bounds = array<i64: 16, 32>}, {pipeline_mode = #tpu.pipeline_mode<synchronous>, transform_indices = @transform_1, window_bounds = array<i64: 1, 32>}, {pipeline_mode = #tpu.pipeline_mode<synchronous>, transform_indices = @transform_2, window_bounds = array<i64: 32, 128>}, {pipeline_mode = #tpu.pipeline_mode<synchronous>, transform_indices = @transform_3, window_bounds = array<i64: 32, 128>}, {pipeline_mode = #tpu.pipeline_mode<synchronous>, transform_indices = @transform_4, window_bounds = array<i64: 1, 128>}, {pipeline_mode = #tpu.pipeline_mode<synchronous>, transform_indices = @transform_5, window_bounds = array<i64: 1, 128>}, {transform_indices = @transform_6, window_bounds = array<i64: 16, 8>}, {transform_indices = @transform_7, window_bounds = array<i64: 16, 8>}, {transform_indices = @transform_8, window_bounds = array<i64: 16, 1>}, {transform_indices = @transform_9, window_bounds = array<i64: 16, 1>}]} {
    %c0 = arith.constant 0 : index
    %c0_0 = arith.constant 0 : index
    %0 = vector.load %arg1[%c0, %c0_0] : memref<16x32xf32, #tpu.memory_space<vmem>>, vector<16x32xf32>
    %c0_1 = arith.constant 0 : index
    %c0_2 = arith.constant 0 : index
    %1 = vector.load %arg2[%c0_1, %c0_2] : memref<1x32xf32, #tpu.memory_space<vmem>>, vector<1x32xf32>
    %2 = arith.truncf %0 : vector<16x32xf32> to vector<16x32xbf16>
    %3 = arith.extf %2 : vector<16x32xbf16> to vector<16x32xf32>
    %4 = arith.subf %0, %3 : vector<16x32xf32>
    %5 = arith.truncf %4 : vector<16x32xf32> to vector<16x32xbf16>
    %c0_3 = arith.constant 0 : index
    %c0_4 = arith.constant 0 : index
    %6 = vector.load %arg3[%c0_3, %c0_4] : memref<32x128xbf16, #tpu.memory_space<vmem>>, vector<32x128xbf16>
    %c0_5 = arith.constant 0 : index
    %c0_6 = arith.constant 0 : index
    %7 = vector.load %arg4[%c0_5, %c0_6] : memref<32x128xbf16, #tpu.memory_space<vmem>>, vector<32x128xbf16>
    %cst = arith.constant dense<0.000000e+00> : vector<16x128xf32>
    %8 = tpu.matmul %2, %6, %cst {dimension_numbers = #tpu.dot_dimension_numbers<[1], [0], [0], [1], [0, 0, 1, 1], [], []>} : vector<16x32xbf16>, vector<32x128xbf16>, vector<16x128xf32> -> vector<16x128xf32>
    %cst_7 = arith.constant dense<0.000000e+00> : vector<16x128xf32>
    %9 = tpu.matmul %5, %6, %cst_7 {dimension_numbers = #tpu.dot_dimension_numbers<[1], [0], [0], [1], [0, 0, 1, 1], [], []>} : vector<16x32xbf16>, vector<32x128xbf16>, vector<16x128xf32> -> vector<16x128xf32>
    %10 = arith.addf %8, %9 : vector<16x128xf32>
    %cst_8 = arith.constant dense<0.000000e+00> : vector<16x128xf32>
    %11 = tpu.matmul %2, %7, %cst_8 {dimension_numbers = #tpu.dot_dimension_numbers<[1], [0], [0], [1], [0, 0, 1, 1], [], []>} : vector<16x32xbf16>, vector<32x128xbf16>, vector<16x128xf32> -> vector<16x128xf32>
    %12 = arith.addf %10, %11 : vector<16x128xf32>
    %13 = arith.mulf %0, %0 : vector<16x32xf32>
    %14 = vector.broadcast %1 : vector<1x32xf32> to vector<16x32xf32>
    %15 = arith.mulf %13, %14 : vector<16x32xf32>
    %cst_9 = arith.constant dense<0.000000e+00> : vector<16xf32>
    %16 = vector.multi_reduction <add>, %15, %cst_9 [1] : vector<16x32xf32> to vector<16xf32>
    %17 = vector.shape_cast %16 : vector<16xf32> to vector<16x1xf32>
    %c0_10 = arith.constant 0 : index
    %c0_11 = arith.constant 0 : index
    %18 = vector.load %arg5[%c0_10, %c0_11] : memref<1x128xf32, #tpu.memory_space<vmem>>, vector<1x128xf32>
    %19 = vector.broadcast %18 : vector<1x128xf32> to vector<16x128xf32>
    %20 = arith.addf %12, %19 : vector<16x128xf32>
    %cst_12 = arith.constant 5.000000e-01 : f32
    %21 = vector.broadcast %cst_12 : f32 to vector<16x1xf32>
    %22 = arith.mulf %21, %17 : vector<16x1xf32>
    %23 = vector.broadcast %22 : vector<16x1xf32> to vector<16x128xf32>
    %24 = arith.subf %20, %23 : vector<16x128xf32>
    %c0_13 = arith.constant 0 : index
    %c0_14 = arith.constant 0 : index
    %25 = vector.load %arg6[%c0_13, %c0_14] : memref<1x128xf32, #tpu.memory_space<vmem>>, vector<1x128xf32>
    %26 = vector.broadcast %25 : vector<1x128xf32> to vector<16x128xf32>
    %27 = arith.addf %24, %26 : vector<16x128xf32>
    %cst_15 = arith.constant dense<0xFF800000> : vector<16xf32>
    %28 = vector.multi_reduction <maximumf>, %27, %cst_15 [1] : vector<16x128xf32> to vector<16xf32>
    %29 = vector.shape_cast %28 : vector<16xf32> to vector<16x1xf32>
    %30 = vector.broadcast %29 : vector<16x1xf32> to vector<16x128xf32>
    %31 = arith.subf %27, %30 : vector<16x128xf32>
    %32 = math.exp %31 : vector<16x128xf32>
    %cst_16 = arith.constant dense<0.000000e+00> : vector<16xf32>
    %33 = vector.multi_reduction <add>, %32, %cst_16 [1] : vector<16x128xf32> to vector<16xf32>
    %34 = vector.shape_cast %33 : vector<16xf32> to vector<16x1xf32>
    %35 = tpu.reciprocal %34 : vector<16x1xf32> -> vector<16x1xf32>
    %36 = vector.broadcast %35 : vector<16x1xf32> to vector<16x128xf32>
    %37 = arith.mulf %32, %36 : vector<16x128xf32>
    %38 = math.log %34 : vector<16x1xf32>
    %39 = arith.addf %29, %38 : vector<16x1xf32>
    %40 = arith.mulf %37, %24 : vector<16x128xf32>
    %cst_17 = arith.constant dense<0.000000e+00> : vector<16xf32>
    %41 = vector.multi_reduction <add>, %40, %cst_17 [1] : vector<16x128xf32> to vector<16xf32>
    %42 = vector.shape_cast %41 : vector<16xf32> to vector<16x1xf32>
    %43 = vector.broadcast %39 : vector<16x1xf32> to vector<16x128xf32>
    %44 = arith.subf %24, %43 : vector<16x128xf32>
    %45 = arith.mulf %37, %44 : vector<16x128xf32>
    %cst_18 = arith.constant dense<0.000000e+00> : vector<16xf32>
    %46 = vector.multi_reduction <add>, %45, %cst_18 [1] : vector<16x128xf32> to vector<16xf32>
    %47 = vector.shape_cast %46 : vector<16xf32> to vector<16x1xf32>
    %48 = vector.extract_strided_slice %37 {offsets = [0, 0], sizes = [16, 8], strides = [1, 1]} : vector<16x128xf32> to vector<16x8xf32>
    %c0_19 = arith.constant 0 : index
    %c0_20 = arith.constant 0 : index
    %49 = vector.load %arg7[%c0_19, %c0_20] : memref<16x8xf32, #tpu.memory_space<vmem>>, vector<16x8xf32>
    tpu.vector_store %arg7[%c0_19, %c0_20], %48 {strides = array<i32>} : memref<16x8xf32, #tpu.memory_space<vmem>>, vector<16x8xf32>,
    %50 = vector.extract_strided_slice %24 {offsets = [0, 0], sizes = [16, 8], strides = [1, 1]} : vector<16x128xf32> to vector<16x8xf32>
    %c0_21 = arith.constant 0 : index
    %c0_22 = arith.constant 0 : index
    %51 = vector.load %arg8[%c0_21, %c0_22] : memref<16x8xf32, #tpu.memory_space<vmem>>, vector<16x8xf32>
    tpu.vector_store %arg8[%c0_21, %c0_22], %50 {strides = array<i32>} : memref<16x8xf32, #tpu.memory_space<vmem>>, vector<16x8xf32>,
    %c0_23 = arith.constant 0 : index
    %c0_24 = arith.constant 0 : index
    %52 = vector.load %arg9[%c0_23, %c0_24] : memref<16x1xf32, #tpu.memory_space<vmem>>, vector<16x1xf32>
    tpu.vector_store %arg9[%c0_23, %c0_24], %42 {strides = array<i32>} : memref<16x1xf32, #tpu.memory_space<vmem>>, vector<16x1xf32>,
    %c0_25 = arith.constant 0 : index
    %c0_26 = arith.constant 0 : index
    %53 = vector.load %arg10[%c0_25, %c0_26] : memref<16x1xf32, #tpu.memory_space<vmem>>, vector<16x1xf32>
    tpu.vector_store %arg10[%c0_25, %c0_26], %47 {strides = array<i32>} : memref<16x1xf32, #tpu.memory_space<vmem>>, vector<16x1xf32>,
    return
  }
  func.func @transform_0(%arg0: i32) -> (i32, i32) {
    %c0_i32 = arith.constant 0 : i32
    %c0_i32_0 = arith.constant 0 : i32
    return %arg0, %c0_i32 : i32, i32
  }
  func.func @transform_1(%arg0: i32) -> (i32, i32) {
    %c0_i32 = arith.constant 0 : i32
    %c0_i32_0 = arith.constant 0 : i32
    %c0_i32_1 = arith.constant 0 : i32
    return %c0_i32, %c0_i32_0 : i32, i32
  }
  func.func @transform_2(%arg0: i32) -> (i32, i32) {
    %c0_i32 = arith.constant 0 : i32
    %c0_i32_0 = arith.constant 0 : i32
    %c0_i32_1 = arith.constant 0 : i32
    return %c0_i32, %c0_i32_0 : i32, i32
  }
  func.func @transform_3(%arg0: i32) -> (i32, i32) {
    %c0_i32 = arith.constant 0 : i32
    %c0_i32_0 = arith.constant 0 : i32
    %c0_i32_1 = arith.constant 0 : i32
    return %c0_i32, %c0_i32_0 : i32, i32
  }
  func.func @transform_4(%arg0: i32) -> (i32, i32) {
    %c0_i32 = arith.constant 0 : i32
    %c0_i32_0 = arith.constant 0 : i32
    %c0_i32_1 = arith.constant 0 : i32
    return %c0_i32, %c0_i32_0 : i32, i32
  }
  func.func @transform_5(%arg0: i32) -> (i32, i32) {
    %c0_i32 = arith.constant 0 : i32
    %c0_i32_0 = arith.constant 0 : i32
    %c0_i32_1 = arith.constant 0 : i32
    return %c0_i32, %c0_i32_0 : i32, i32
  }
  func.func @transform_6(%arg0: i32) -> (i32, i32) {
    %c0_i32 = arith.constant 0 : i32
    %c0_i32_0 = arith.constant 0 : i32
    return %arg0, %c0_i32 : i32, i32
  }
  func.func @transform_7(%arg0: i32) -> (i32, i32) {
    %c0_i32 = arith.constant 0 : i32
    %c0_i32_0 = arith.constant 0 : i32
    return %arg0, %c0_i32 : i32, i32
  }
  func.func @transform_8(%arg0: i32) -> (i32, i32) {
    %c0_i32 = arith.constant 0 : i32
    %c0_i32_0 = arith.constant 0 : i32
    return %arg0, %c0_i32 : i32, i32
  }
  func.func @transform_9(%arg0: i32) -> (i32, i32) {
    %c0_i32 = arith.constant 0 : i32
    %c0_i32_0 = arith.constant 0 : i32
    return %arg0, %c0_i32 : i32, i32
  }
}

</mosaic_0001>

<llo_original>
// kernel: tpu_custom_call.1
$region0: #{tpu_custom_call.1}
  #allocation0 [shape = 'u32[]', space=smem, size = 0x4, offset = 0x4, fixed_abs, tag = 'smem constant byte address 0x4 - core index']
  #allocation1 [shape = 'u32[144,128]{1,0:T(1,128)}', space=vmem, size = 0x12000, scoped, tag = 'internal scratch']
  %s0 = inlined_call_operand.hbm [shape: f32[16,32], index: 0, kind: input, shape index: {}]
  %s1 = inlined_call_operand.vmem [shape: f32[1,32], index: 1, kind: input, shape index: {}]
  %s2 = inlined_call_operand.hbm [shape: bf16[32,128], index: 2, kind: input, shape index: {}]
  %s3 = inlined_call_operand.hbm [shape: bf16[32,128], index: 3, kind: input, shape index: {}]
  %s4 = inlined_call_operand.vmem [shape: f32[1,128], index: 4, kind: input, shape index: {}]
  %s5 = inlined_call_operand.vmem [shape: f32[1,128], index: 5, kind: input, shape index: {}]
  %s6 = inlined_call_operand.vmem [shape: f32[16,8], index: 6, kind: output, shape index: {0}]
  %s7 = inlined_call_operand.vmem [shape: f32[16,8], index: 7, kind: output, shape index: {1}]
  %s8 = inlined_call_operand.vmem [shape: f32[16,1], index: 8, kind: output, shape index: {2}]
  %s9 = inlined_call_operand.vmem [shape: f32[16,1], index: 9, kind: output, shape index: {3}]
  %10 = xla_tuple %s6, %s7, %s8, %s9
  %s11 = sld [smem:[#allocation0]]
  $region70: #{tpu_custom_call.1} parent=0
    _
  %s13 = ssub.s32 1, %s11
  %s14 = scalar_select 0, %s13, %s11
  $region1: #{tpu_custom_call.1} parent=0
    #allocation2 [shape = 'u8[8192]{0}', space=vmem, size = 0x2000, scoped, tag = 'input window, operand 0, single buffered']
    #allocation3 [shape = 's32[1]{0}', space=sflag, size = 0x4, scoped, tag = 'scoped memory for tpu_custom_call.1']
    #allocation4 [shape = 'u8[8192]{0}', space=vmem, size = 0x2000, scoped, tag = 'input window, operand 2, single buffered']
    #allocation5 [shape = 's32[1]{0}', space=sflag, size = 0x4, scoped, tag = 'scoped memory for tpu_custom_call.1']
    #allocation6 [shape = 'u8[8192]{0}', space=vmem, size = 0x2000, scoped, tag = 'input window, operand 3, single buffered']
    %15 = vsyncpa [#allocation3], 0
    %16 = vsyncpa [#allocation5], 0
    // Predicated region
    $region2: #{tpu_custom_call.1} parent=1 // pred_check
      _
    $region3: #{tpu_custom_call.1} parent=1 // pred_check_branch
      %18 = sbr.rel (0) target = $region5
    $region4: #{tpu_custom_call.1} parent=1 // pred_region
      %s20 = ssub.s32 256, 256
      %21 = vsyncadd [#allocation3], %s20
      %s22 = sshll.u32 [#allocation2], 4
      %s23 = int_to_ptr.vmem [resolvable:$true] %s22
      %28 = dma.hbm_to_vmem [thread:$0]  %s0, 256, %s23, [#allocation3], 128, 128, 8
    $region5: #{tpu_custom_call.1} parent=1 // pred_fallthru
      _
    // Predicated region
    $region6: #{tpu_custom_call.1} parent=1 // pred_check
      _
    $region7: #{tpu_custom_call.1} parent=1 // pred_check_branch
      %30 = sbr.rel (0) target = $region9
    $region8: #{tpu_custom_call.1} parent=1 // pred_region
      _
    $region9: #{tpu_custom_call.1} parent=1 // pred_fallthru
      _
    // Predicated region
    $region10: #{tpu_custom_call.1} parent=1 // pred_check
      _
    $region11: #{tpu_custom_call.1} parent=1 // pred_check_branch
      %32 = sbr.rel (0) target = $region13
    $region12: #{tpu_custom_call.1} parent=1 // pred_region
      %s34 = ssub.s32 256, 256
      %35 = vsyncadd [#allocation5], %s34
      %s36 = sshll.u32 [#allocation4], 4
      %s37 = int_to_ptr.vmem [resolvable:$true] %s36
      %42 = dma.hbm_to_vmem [thread:$0]  %s2, 256, %s37, [#allocation5], 64, 64, 4
    $region13: #{tpu_custom_call.1} parent=1 // pred_fallthru
      _
    // Predicated region
    $region14: #{tpu_custom_call.1} parent=1 // pred_check
      _
    $region15: #{tpu_custom_call.1} parent=1 // pred_check_branch
      %44 = sbr.rel (0) target = $region17
    $region16: #{tpu_custom_call.1} parent=1 // pred_region
      %s46 = ssub.s32 256, 256
      %47 = vsyncadd [#allocation5], %s46
      %s48 = sshll.u32 [#allocation6], 4
      %s49 = int_to_ptr.vmem [resolvable:$true] %s48
      %54 = dma.hbm_to_vmem [thread:$0]  %s3, 256, %s49, [#allocation5], 64, 64, 4
    $region17: #{tpu_custom_call.1} parent=1 // pred_fallthru
      _
    // Predicated region
    $region18: #{tpu_custom_call.1} parent=1 // pred_check
      _
    $region19: #{tpu_custom_call.1} parent=1 // pred_check_branch
      %56 = sbr.rel (0) target = $region21
    $region20: #{tpu_custom_call.1} parent=1 // pred_region
      _
    $region21: #{tpu_custom_call.1} parent=1 // pred_fallthru
      _
    // Predicated region
    $region22: #{tpu_custom_call.1} parent=1 // pred_check
      _
    $region23: #{tpu_custom_call.1} parent=1 // pred_check_branch
      %58 = sbr.rel (0) target = $region25
    $region24: #{tpu_custom_call.1} parent=1 // pred_region
      _
    $region25: #{tpu_custom_call.1} parent=1 // pred_fallthru
      _
    // Predicated region
    $region26: #{tpu_custom_call.1} parent=1 // pred_check
      _
    $region27: #{tpu_custom_call.1} parent=1 // pred_check_branch
      %60 = sbr.rel (0) target = $region29
    $region28: #{tpu_custom_call.1} parent=1 // pred_region
      %61 = dma.done [#allocation3], 256
    $region29: #{tpu_custom_call.1} parent=1 // pred_fallthru
      _
    // Predicated region
    $region30: #{tpu_custom_call.1} parent=1 // pred_check
      _
    $region31: #{tpu_custom_call.1} parent=1 // pred_check_branch
      %63 = sbr.rel (0) target = $region33
    $region32: #{tpu_custom_call.1} parent=1 // pred_region
      %64 = dma.done [#allocation5], 256
    $region33: #{tpu_custom_call.1} parent=1 // pred_fallthru
      _
    // Predicated region
    $region34: #{tpu_custom_call.1} parent=1 // pred_check
      _
    $region35: #{tpu_custom_call.1} parent=1 // pred_check_branch
      %66 = sbr.rel (0) target = $region37
    $region36: #{tpu_custom_call.1} parent=1 // pred_region
      %67 = dma.done [#allocation5], 256
    $region37: #{tpu_custom_call.1} parent=1 // pred_fallthru
      _
    %v69 = vld [vmem:[#allocation2] sm:$0xff]
    %v70 = vld [vmem:[#allocation2 + $0x8] sm:$0xff]
    %v71 = vld [vmem:[%s1] sm:$0x1]
    %v72 = vpack.c.bf16 %v70, %v69
    %v73 = vunpack.c.l.bf16 %v72
    %v74 = vunpack.c.h.bf16 %v72
    %v75 = vsub.f32 %v69, %v73
    %v76 = vsub.f32 %v70, %v74
    %v77 = vpack.c.bf16 %v76, %v75
    %v78 = vld [vmem:[#allocation4] sm:$0xf]
    %v79 = vld [vmem:[#allocation4 + $0x4] sm:$0xf]
    %v80 = vld [vmem:[#allocation4 + $0x8] sm:$0xf]
    %v81 = vld [vmem:[#allocation4 + $0xc] sm:$0xf]
    %v82 = vld [vmem:[#allocation6] sm:$0xf]
    %v83 = vld [vmem:[#allocation6 + $0x4] sm:$0xf]
    %v84 = vld [vmem:[#allocation6 + $0x8] sm:$0xf]
    %v85 = vld [vmem:[#allocation6 + $0xc] sm:$0xf]
    %v90 = vunpack.c.l.b16 %v78
    %v91 = vunpack.c.l.b16 %v79
    %v92 = vunpack.c.l.b16 %v80
    %v93 = vunpack.c.l.b16 %v81
    %v94 = vpack.c.b16 %v91, %v90
    %v95 = vpack.c.b16 %v93, %v92
    %vm98 = vcmask 261120
    %v100 = vsel %vm98, %v77, 0
    %102 = vmatprep.subr.bf16.mxu0 0
    %103 = vmatpush1.bf16.msra.mxu0 0
    %104 = vmatprep.subr.bf16.mxu0 0
    %105 = vmatpush1.bf16.msra.mxu0 0
    %106 = vmatprep.subr.bf16.mxu0 0
    %107 = vmatpush1.bf16.msra.mxu0 0
    %108 = vmatprep.subr.bf16.mxu0 0
    %109 = vmatpush1.bf16.msra.mxu0 0
    %110 = vmatprep.subr.bf16.mxu0 0
    %111 = vmatpush1.bf16.msra.mxu0 0
    %112 = vmatprep.subr.bf16.mxu0 0
    %113 = vmatpush1.bf16.msra.mxu0 0
    %114 = vmatprep.subr.bf16.mxu0 0
    %115 = vmatpush1.bf16.msra.mxu0 %v95
    %116 = vmatprep.subr.bf16.mxu0 0
    %117 = vmatpush1.bf16.msra.mxu0 %v94
    %118 = vmatprep.subr.bf16.mxu0 0
    %119 = vmatpush2.bf16.msra.mxu0 0
    %120 = vmatprep.subr.bf16.mxu0 0
    %121 = vmatpush2.bf16.msra.mxu0 0
    %122 = vmatprep.subr.bf16.mxu0 0
    %123 = vmatpush2.bf16.msra.mxu0 0
    %124 = vmatprep.subr.bf16.mxu0 0
    %125 = vmatpush2.bf16.msra.mxu0 0
    %126 = vmatprep.subr.bf16.mxu0 0
    %127 = vmatpush2.bf16.msra.mxu0 0
    %128 = vmatprep.subr.bf16.mxu0 0
    %129 = vmatpush2.bf16.msra.mxu0 0
    %130 = vmatprep.subr.bf16.mxu0 0
    %131 = vmatpush2.bf16.msra.mxu0 0
    %132 = vmatprep.subr.bf16.mxu0 0
    %133 = vmatpush2.bf16.msra.mxu0 0
    %134 = vmatprep.mubr.bf16.mxu0 0
    %135 = vmatmul.mubr.bf16.gmra.mxu0 %v100
    %v136 = vpop.f32.mrf.mxu0
    %v137 = vadd.f32 0.0, %v136
    %v138 = vpop.f32.mrf.mxu0
    %v139 = vpop.f32.mrf.mxu0
    %v140 = vadd.f32 0.0, %v139
    %v141 = vpop.f32.mrf.mxu0
    %142 = vdwg.mxu0
    %v144 = vsel %vm98, %v72, 0
    %146 = vmatprep.subr.bf16.mxu0 0
    %147 = vmatpush1.bf16.msra.mxu0 0
    %148 = vmatprep.subr.bf16.mxu0 0
    %149 = vmatpush1.bf16.msra.mxu0 0
    %150 = vmatprep.subr.bf16.mxu0 0
    %151 = vmatpush1.bf16.msra.mxu0 0
    %152 = vmatprep.subr.bf16.mxu0 0
    %153 = vmatpush1.bf16.msra.mxu0 0
    %154 = vmatprep.subr.bf16.mxu0 0
    %155 = vmatpush1.bf16.msra.mxu0 0
    %156 = vmatprep.subr.bf16.mxu0 0
    %157 = vmatpush1.bf16.msra.mxu0 0
    %158 = vmatprep.subr.bf16.mxu0 0
    %159 = vmatpush1.bf16.msra.mxu0 %v95
    %160 = vmatprep.subr.bf16.mxu0 0
    %161 = vmatpush1.bf16.msra.mxu0 %v94
    %162 = vmatprep.subr.bf16.mxu0 0
    %163 = vmatpush2.bf16.msra.mxu0 0
    %164 = vmatprep.subr.bf16.mxu0 0
    %165 = vmatpush2.bf16.msra.mxu0 0
    %166 = vmatprep.subr.bf16.mxu0 0
    %167 = vmatpush2.bf16.msra.mxu0 0
    %168 = vmatprep.subr.bf16.mxu0 0
    %169 = vmatpush2.bf16.msra.mxu0 0
    %170 = vmatprep.subr.bf16.mxu0 0
    %171 = vmatpush2.bf16.msra.mxu0 0
    %172 = vmatprep.subr.bf16.mxu0 0
    %173 = vmatpush2.bf16.msra.mxu0 0
    %174 = vmatprep.subr.bf16.mxu0 0
    %175 = vmatpush2.bf16.msra.mxu0 0
    %176 = vmatprep.subr.bf16.mxu0 0
    %177 = vmatpush2.bf16.msra.mxu0 0
    %178 = vmatprep.mubr.bf16.mxu0 0
    %179 = vmatmul.mubr.bf16.gmra.mxu0 %v144
    %v180 = vpop.f32.mrf.mxu0
    %v181 = vadd.f32 %v137, %v180
    %v182 = vpop.f32.mrf.mxu0
    %v183 = vpop.f32.mrf.mxu0
    %v184 = vadd.f32 %v140, %v183
    %v185 = vpop.f32.mrf.mxu0
    %186 = vdwg.mxu0
    %v191 = vunpack.c.l.b16 %v82
    %v192 = vunpack.c.l.b16 %v83
    %v193 = vunpack.c.l.b16 %v84
    %v194 = vunpack.c.l.b16 %v85
    %v195 = vpack.c.b16 %v192, %v191
    %v196 = vpack.c.b16 %v194, %v193
    %199 = vmatprep.subr.bf16.mxu0 0
    %200 = vmatpush1.bf16.msra.mxu0 0
    %201 = vmatprep.subr.bf16.mxu0 0
    %202 = vmatpush1.bf16.msra.mxu0 0
    %203 = vmatprep.subr.bf16.mxu0 0
    %204 = vmatpush1.bf16.msra.mxu0 0
    %205 = vmatprep.subr.bf16.mxu0 0
    %206 = vmatpush1.bf16.msra.mxu0 0
    %207 = vmatprep.subr.bf16.mxu0 0
    %208 = vmatpush1.bf16.msra.mxu0 0
    %209 = vmatprep.subr.bf16.mxu0 0
    %210 = vmatpush1.bf16.msra.mxu0 0
    %211 = vmatprep.subr.bf16.mxu0 0
    %212 = vmatpush1.bf16.msra.mxu0 %v196
    %213 = vmatprep.subr.bf16.mxu0 0
    %214 = vmatpush1.bf16.msra.mxu0 %v195
    %215 = vmatprep.subr.bf16.mxu0 0
    %216 = vmatpush2.bf16.msra.mxu0 0
    %217 = vmatprep.subr.bf16.mxu0 0
    %218 = vmatpush2.bf16.msra.mxu0 0
    %219 = vmatprep.subr.bf16.mxu0 0
    %220 = vmatpush2.bf16.msra.mxu0 0
    %221 = vmatprep.subr.bf16.mxu0 0
    %222 = vmatpush2.bf16.msra.mxu0 0
    %223 = vmatprep.subr.bf16.mxu0 0
    %224 = vmatpush2.bf16.msra.mxu0 0
    %225 = vmatprep.subr.bf16.mxu0 0
    %226 = vmatpush2.bf16.msra.mxu0 0
    %227 = vmatprep.subr.bf16.mxu0 0
    %228 = vmatpush2.bf16.msra.mxu0 0
    %229 = vmatprep.subr.bf16.mxu0 0
    %230 = vmatpush2.bf16.msra.mxu0 0
    %231 = vmatprep.mubr.bf16.mxu0 0
    %232 = vmatmul.mubr.bf16.gmra.mxu0 %v144
    %v233 = vpop.f32.mrf.mxu0
    %v234 = vadd.f32 0.0, %v233
    %v235 = vpop.f32.mrf.mxu0
    %v236 = vpop.f32.mrf.mxu0
    %v237 = vadd.f32 0.0, %v236
    %v238 = vpop.f32.mrf.mxu0
    %239 = vdwg.mxu0
    %v240 = vadd.f32 %v181, %v234
    %v241 = vadd.f32 %v184, %v237
    %v242 = vmul.f32 %v69, %v69
    %v243 = vmul.f32 %v70, %v70
    %v245 = vlaneseq
    %v246 = vshrl.u32 %v245, 7
    %v247 = vsub.s32 0, %v246
    %v248 = vrot.slane %v71, %v247
    %v250 = vmul.f32 %v242, %v248
    %v251 = vmul.f32 %v243, %v248
    %v252 = vsel %vm98, %v250, 0.0
    %253 = vadd.xlane.f32.xlu0 %v252
    %v254 = vpop.xlane.xlu0 %253
    %v255 = vsel %vm98, %v251, 0.0
    %256 = vadd.xlane.f32.xlu0 %v255
    %v257 = vpop.xlane.xlu0 %256
    %v258 = vld [vmem:[%s4] sm:$0x1]
    %v260 = vlaneseq
    %v261 = vshrl.u32 %v260, 7
    %v262 = vsub.s32 0, %v261
    %v263 = vrot.slane %v258, %v262
    %v265 = vadd.f32 %v240, %v263
    %v266 = vadd.f32 %v241, %v263
    %v267 = vmul.f32 %v254, 0.5
    %v268 = vmul.f32 %v257, 0.5
    %v269 = vsub.f32 %v265, %v267
    %v270 = vsub.f32 %v266, %v268
    %v271 = vld [vmem:[%s5] sm:$0x1]
    %v273 = vlaneseq
    %v274 = vshrl.u32 %v273, 7
    %v275 = vsub.s32 0, %v274
    %v276 = vrot.slane %v271, %v275
    %v278 = vadd.f32 %v269, %v276
    %v279 = vadd.f32 %v270, %v276
    %280 = vmax.xlane.f32.xlu0 %v278
    %v281 = vpop.xlane.xlu0 %280
    %282 = vmax.xlane.f32.xlu0 %v279
    %v283 = vpop.xlane.xlu0 %282
    %v284 = vsub.f32 %v278, %v281
    %v285 = vsub.f32 %v279, %v283
    %v286 = vmul.f32 %v284, 1.442695
    %v287 = vpow.pop %v286
    %v288 = vmul.f32 %v285, 1.442695
    %v289 = vpow.pop %v288
    %290 = vadd.xlane.f32.xlu0 %v287
    %v291 = vpop.xlane.xlu0 %290
    %292 = vadd.xlane.f32.xlu0 %v289
    %v293 = vpop.xlane.xlu0 %292
    %v294 = vrcp.pop %v291
    %v295 = vrcp.pop %v293
    %v296 = vmul.f32 %v287, %v294
    %v297 = vmul.f32 %v289, %v295
    %v298 = vlog2.pop %v291
    %v299 = vmul.f32 %v298, 0.6931472
    %v300 = vlog2.pop %v293
    %v301 = vmul.f32 %v300, 0.6931472
    %v302 = vadd.f32 %v281, %v299
    %v303 = vadd.f32 %v283, %v301
    %v304 = vmul.f32 %v296, %v269
    %v305 = vmul.f32 %v297, %v270
    %306 = vadd.xlane.f32.xlu0 %v304
    %v307 = vpop.xlane.xlu0 %306
    %308 = vadd.xlane.f32.xlu0 %v305
    %v309 = vpop.xlane.xlu0 %308
    %v310 = vsub.f32 %v269, %v302
    %v311 = vsub.f32 %v270, %v303
    %v312 = vmul.f32 %v296, %v310
    %v313 = vmul.f32 %v297, %v311
    %314 = vadd.xlane.f32.xlu0 %v312
    %v315 = vpop.xlane.xlu0 %314
    %316 = vadd.xlane.f32.xlu0 %v313
    %v317 = vpop.xlane.xlu0 %316
    %vm318 = vcmask 64512
    %319 = vst.msk [vmem:[%s6] sm:$0xff] %vm318, %v296
    %320 = vst.msk [vmem:[%s6 + $0x8] sm:$0xff] %vm318, %v297
    %321 = vst.msk [vmem:[%s7] sm:$0xff] %vm318, %v269
    %322 = vst.msk [vmem:[%s7 + $0x8] sm:$0xff] %vm318, %v270
    %vm323 = vcmask 7168
    %324 = vst.msk [vmem:[%s8] sm:$0xff] %vm323, %v307
    %325 = vst.msk [vmem:[%s8 + $0x8] sm:$0xff] %vm323, %v309
    %326 = vst.msk [vmem:[%s9] sm:$0xff] %vm323, %v315
    %327 = vst.msk [vmem:[%s9 + $0x8] sm:$0xff] %vm323, %v317
    // Predicated region
    $region38: #{tpu_custom_call.1} parent=1 // pred_check
      _
    $region39: #{tpu_custom_call.1} parent=1 // pred_check_branch
      %329 = sbr.rel (0) target = $region41
    $region40: #{tpu_custom_call.1} parent=1 // pred_region
      _
    $region41: #{tpu_custom_call.1} parent=1 // pred_fallthru
      _
    // Predicated region
    $region42: #{tpu_custom_call.1} parent=1 // pred_check
      _
    $region43: #{tpu_custom_call.1} parent=1 // pred_check_branch
      %331 = sbr.rel (0) target = $region45
    $region44: #{tpu_custom_call.1} parent=1 // pred_region
      _
    $region45: #{tpu_custom_call.1} parent=1 // pred_fallthru
      _
    // Predicated region
    $region46: #{tpu_custom_call.1} parent=1 // pred_check
      _
    $region47: #{tpu_custom_call.1} parent=1 // pred_check_branch
      %333 = sbr.rel (0) target = $region49
    $region48: #{tpu_custom_call.1} parent=1 // pred_region
      _
    $region49: #{tpu_custom_call.1} parent=1 // pred_fallthru
      _
    // Predicated region
    $region50: #{tpu_custom_call.1} parent=1 // pred_check
      _
    $region51: #{tpu_custom_call.1} parent=1 // pred_check_branch
      %335 = sbr.rel (0) target = $region53
    $region52: #{tpu_custom_call.1} parent=1 // pred_region
      _
    $region53: #{tpu_custom_call.1} parent=1 // pred_fallthru
      _
    // Predicated region
    $region54: #{tpu_custom_call.1} parent=1 // pred_check
      _
    $region55: #{tpu_custom_call.1} parent=1 // pred_check_branch
      %337 = sbr.rel (0) target = $region57
    $region56: #{tpu_custom_call.1} parent=1 // pred_region
      _
    $region57: #{tpu_custom_call.1} parent=1 // pred_fallthru
      _
    // Predicated region
    $region58: #{tpu_custom_call.1} parent=1 // pred_check
      _
    $region59: #{tpu_custom_call.1} parent=1 // pred_check_branch
      %339 = sbr.rel (0) target = $region61
    $region60: #{tpu_custom_call.1} parent=1 // pred_region
      _
    $region61: #{tpu_custom_call.1} parent=1 // pred_fallthru
      _
    // Predicated region
    $region62: #{tpu_custom_call.1} parent=1 // pred_check
      _
    $region63: #{tpu_custom_call.1} parent=1 // pred_check_branch
      %341 = sbr.rel (0) target = $region65
    $region64: #{tpu_custom_call.1} parent=1 // pred_region
      _
    $region65: #{tpu_custom_call.1} parent=1 // pred_fallthru
      _
    // Predicated region
    $region66: #{tpu_custom_call.1} parent=1 // pred_check
      _
    $region67: #{tpu_custom_call.1} parent=1 // pred_check_branch
      %343 = sbr.rel (0) target = $region69
    $region68: #{tpu_custom_call.1} parent=1 // pred_region
      _
    $region69: #{tpu_custom_call.1} parent=1 // pred_fallthru
      _
    %344 = vsyncpa [#allocation3], 1
    %345 = vsyncpa [#allocation5], 1

</llo_original>
